<compile_context>
chip_gen: v5e
topology: v5e:2x2
jax: 0.10.0
libtpu: 0.0.40
codegen_flags: <defaults>
</compile_context>

<pallas_src>
import functools
import math

import numpy as np
import jax
import jax.numpy as jnp
from jax.experimental import pallas as pl
from jax.experimental.pallas import tpu as pltpu


# --------------------------------------------------------------------------------------
# Parameter construction (plain JAX glue -- mirrors the PyTorch __init__)
# --------------------------------------------------------------------------------------
def build_window(fft_size, window_fn="hann"):
    n = jnp.arange(fft_size, dtype=jnp.float32)
    if window_fn == "hann":
        # periodic hann window (torch.hann_window(fft_size, periodic=True))
        return 0.5 - 0.5 * jnp.cos(2.0 * math.pi * n / fft_size)
    raise ValueError(f"unsupported window_fn {window_fn}")


def build_optimal_window(window, hop_size):
    fft_size = window.shape[0]
    windows = jnp.stack(
        [jnp.roll(window, hop_size * idx) for idx in range(fft_size // hop_size)], axis=0
    )
    norm = jnp.sum(windows ** 2, axis=0)
    return window / norm


def build_fourier_bases(fft_size, normalize=False):
    k = jnp.arange(fft_size, dtype=jnp.float32)
    n = jnp.arange(fft_size, dtype=jnp.float32)
    K, N = jnp.meshgrid(k, n, indexing="ij")
    cos_bases = jnp.cos(2.0 * math.pi * K * N / fft_size)
    sin_bases = jnp.sin(2.0 * math.pi * K * N / fft_size)
    if normalize:
        cos_bases = cos_bases / math.sqrt(fft_size)
        sin_bases = sin_bases / math.sqrt(fft_size)
    return cos_bases, sin_bases


def build_inv_stft_bases(fft_size, hop_size=None, window_fn="hann", normalize=False):
    if hop_size is None:
        hop_size = fft_size // 2
    window = build_window(fft_size, window_fn=window_fn)
    optimal_window = build_optimal_window(window, hop_size=hop_size)
    cos_bases, sin_bases = build_fourier_bases(fft_size, normalize=normalize)
    cos_bases = cos_bases[: fft_size // 2 + 1] * optimal_window
    sin_bases = -sin_bases[: fft_size // 2 + 1] * optimal_window
    if not normalize:
        cos_bases = cos_bases / fft_size
        sin_bases = sin_bases / fft_size
    bases = jnp.concatenate([cos_bases, sin_bases], axis=0)  # (fft_size + 2, fft_size)
    return bases, hop_size


# --------------------------------------------------------------------------------------
# Pallas kernel: fused synthesis matmul + slice-accumulate overlap-add with halo carry
# --------------------------------------------------------------------------------------
def _make_istft_kernel(TF, H, R):
    """TF: frames per tile, H: hop size, R: fft_size // hop_size (overlap factor)."""

    def kernel(x_ref, w_ref, o_ref, acc_ref):
        # x_ref:   (1, K, TF)        spectrum channels (K = fft_size + 2), natural layout
        # w_ref:   (F, K)            effective synthesis weight, transposed (F = R * H)
        # o_ref:   (1, H, TF)        output chunks, chunk-major (lane dim = TF)
        # acc_ref: (H, TF + R - 1)   VMEM OLA accumulator; last R-1 cols = carried halo
        f = pl.program_id(1)

        @pl.when(f == 0)
        def _init():
            acc_ref[...] = jnp.zeros_like(acc_ref)

        if R > 1:
            @pl.when(f > 0)
            def _carry():
                # carry the partial sums for the first R-1 chunks of this tile
                halo = acc_ref[:, TF:TF + R - 1]
                acc_ref[...] = jnp.zeros_like(acc_ref)
                acc_ref[:, 0:R - 1] = halo
        else:
            @pl.when(f > 0)
            def _reset():
                acc_ref[...] = jnp.zeros_like(acc_ref)

        # One fused MXU matmul per tile: (F, K) @ (K, TF) -> (F, TF), f32 accumulation.
        seg = jnp.dot(w_ref[...], x_ref[0], preferred_element_type=jnp.float32)

        # Overlap-add: hop-chunk r of frame l lands on output chunk (l + r).
        # Slice-accumulate touches only TF columns per r; single live accumulator.
        for r in range(R):  # static, tiny (R = fft_size // hop_size)
            acc_ref[:, r:r + TF] += seg[r * H:(r + 1) * H, :]

        # Chunks [f*TF, (f+1)*TF) are complete (no later frame touches them) -> emit.
        o_ref[0] = acc_ref[:, 0:TF].astype(o_ref.dtype)

    return kernel


def batch_inv_stft(spec, bases, fft_size, hop_size, T=None, *,
                   compute_dtype=jnp.float32, frame_tile=256, vmem_limit_bytes=None):
    """spec: (B, n_bins, n_frames, 2), n_bins = fft_size // 2 + 1  ->  (B, T_out)."""
    assert fft_size % hop_size == 0, "overlap-add path assumes hop_size | fft_size"
    # TODO(synk): general hop_size that does not divide fft_size needs a different OLA tiling.
    B, n_bins, n_frames, _ = spec.shape
    assert n_bins == fft_size // 2 + 1
    F, H = fft_size, hop_size
    R = F // H
    K = F + 2

    # ---- fold the duplicated spectrum channels into the weight (K = F + 2, not 2F) ----
    # torch forward pairs real[1:-1] / imag[1:-1] with repeated cos/sin rows; pre-double
    # those rows instead so the kernel only sees [real, imag].
    w_eff = bases
    w_eff = w_eff.at[1:F // 2].multiply(2.0)            # interior cos rows
    w_eff = w_eff.at[F // 2 + 2:F + 1].multiply(2.0)    # interior sin rows
    w_t = jnp.transpose(w_eff).astype(compute_dtype)    # (F, K): natural MXU layout

    # ---- activations in natural (B, channel, frame) layout: no input transpose ----
    real = spec[..., 0]
    imag = spec[..., 1]
    x = jnp.concatenate([real, imag], axis=1).astype(compute_dtype)   # (B, K, L)

    # ---- frame tiling (bounds per-step VMEM; lane-aligned tiles for long sequences) ----
    if n_frames <= frame_tile:
        TF = n_frames
    else:
        TF = max(128, (frame_tile // 128) * 128)
    Lp = ((n_frames + TF - 1) // TF) * TF
    if Lp != n_frames:
        x = jnp.pad(x, ((0, 0), (0, 0), (0, Lp - n_frames)))
    NF = Lp // TF

    kernel = _make_istft_kernel(TF, H, R)

    out = pl.pallas_call(
        kernel,
        out_shape=jax.ShapeDtypeStruct((B, H, Lp), jnp.float32),
        grid_spec=pltpu.PrefetchScalarGridSpec(
            num_scalar_prefetch=0,
            grid=(B, NF),
            in_specs=[
                pl.BlockSpec((1, K, TF), lambda b, f: (b, 0, f)),
                pl.BlockSpec((F, K), lambda b, f: (0, 0)),   # constant -> DMA'd once
            ],
            out_specs=pl.BlockSpec((1, H, TF), lambda b, f: (b, 0, f)),
            scratch_shapes=[pltpu.VMEM((H, TF + R - 1), jnp.float32)],
        ),
        compiler_params=pltpu.CompilerParams(
            # batch axis parallel (sharded across v7x's two TensorCores);
            # frame axis arbitrary (carries the OLA halo in scratch).
            dimension_semantics=("parallel", "arbitrary"),
            # For large fft_size / frame tiles set e.g. 48 MiB here (default scoped VMEM
            # is 16-32 MiB); left at None for the small demo shapes.
            vmem_limit_bytes=vmem_limit_bytes,
        ),
    )(x, w_t)

    # (B, H, Lp) chunk-major -> (B, Lp*H) time series.  Only the first n_frames chunks
    # can survive the crop: padding_right >= fft_size = R*H, so the trailing R-1 halo
    # chunks (never emitted by the kernel) are always inside the cropped region.
    full = jnp.transpose(out, (0, 2, 1)).reshape(B, Lp * H)

    # F.pad(output, (-padding_left, -padding_right)) == crop
    if T is None:
        padding = 2 * F
    else:
        padding = (H - (T - F) % H) % H + 2 * F
    padding_left = padding // 2
    padding_right = padding - padding_left
    T_full = (n_frames - 1) * H + F
    return full[:, padding_left:T_full - padding_right]


# --------------------------------------------------------------------------------------
# Pure-JAX reference (literal conv_transpose1d semantics, un-folded channels)
# --------------------------------------------------------------------------------------
def reference_inv_stft(spec, bases, fft_size, hop_size, T=None):
    B, n_bins, n_frames, _ = spec.shape
    real, imag = spec[..., 0], spec[..., 1]
    x_ch = jnp.concatenate([real, imag, real[:, 1:-1], imag[:, 1:-1]], axis=1)  # (B, 2F, L)
    w = jnp.concatenate(
        [bases, bases[1: fft_size // 2], bases[-(fft_size // 2): -1]], axis=0
    )  # (2F, F)
    T_full = (n_frames - 1) * hop_size + fft_size
    out = jnp.zeros((B, T_full), jnp.float32)
    for l in range(n_frames):
        seg = x_ch[:, :, l] @ w  # (B, F)
        out = out.at[:, l * hop_size: l * hop_size + fft_size].add(seg)
    if T is None:
        padding = 2 * fft_size
    else:
        padding = (hop_size - (T - fft_size) % hop_size) % hop_size + 2 * fft_size
    pad_l = padding // 2
    pad_r = padding - pad_l
    return out[:, pad_l: T_full - pad_r]


if __name__ == "__main__":
    fft_size = 16
    hop_size = fft_size // 2       # default in the module
    batch = 2
    n_bins = fft_size // 2 + 1     # 9

    bases, hop_size = build_inv_stft_bases(fft_size, hop_size, window_fn="hann",
                                           normalize=False)
    key = jax.random.PRNGKey(0)

    # ---------------- config A: small, single frame tile ----------------
    n_frames = 8
    spec = jax.random.normal(key, (batch, n_bins, n_frames, 2), dtype=jnp.float32)

    run_f32 = jax.jit(functools.partial(
        batch_inv_stft, fft_size=fft_size, hop_size=hop_size, T=None))
    out = jax.block_until_ready(run_f32(spec, bases))
    ref = reference_inv_stft(spec, bases, fft_size, hop_size, T=None)
    assert out.shape == ref.shape, (out.shape, ref.shape)
    np.testing.assert_allclose(np.asarray(out), np.asarray(ref), rtol=5e-4, atol=5e-4)

    # bf16 operands / f32 accumulation variant (v5e/v6e MXU throughput path)
    run_bf16 = jax.jit(functools.partial(
        batch_inv_stft, fft_size=fft_size, hop_size=hop_size, T=None,
        compute_dtype=jnp.bfloat16))
    out_bf16 = jax.block_until_ready(run_bf16(spec, bases))
    assert out_bf16.shape == ref.shape
    assert float(jnp.max(jnp.abs(out_bf16 - ref))) < 5e-2

    # ------- config B: multiple frame tiles (exercises halo carry + frame padding) -------
    n_frames_b = 200
    spec_b = jax.random.normal(jax.random.PRNGKey(1),
                               (batch, n_bins, n_frames_b, 2), dtype=jnp.float32)
    run_tiled = jax.jit(functools.partial(
        batch_inv_stft, fft_size=fft_size, hop_size=hop_size, T=None, frame_tile=128))
    out_b = jax.block_until_ready(run_tiled(spec_b, bases))
    ref_b = reference_inv_stft(spec_b, bases, fft_size, hop_size, T=None)
    assert out_b.shape == ref_b.shape, (out_b.shape, ref_b.shape)
    np.testing.assert_allclose(np.asarray(out_b), np.asarray(ref_b), rtol=5e-4, atol=5e-4)

    print("KERNEL_OK")
</pallas_src>

<mosaic_0001>
module attributes {stable_mosaic.version = 11 : i64} {
  func.func @kernel(%arg0: i32, %arg1: i32, %arg2: memref<1x18x8xf32, #tpu.memory_space<vmem>>, %arg3: memref<16x18xf32, #tpu.memory_space<vmem>>, %arg4: memref<1x8x8xf32, #tpu.memory_space<vmem>>, %arg5: memref<8x9xf32, #tpu.memory_space<vmem>>) attributes {dimension_semantics = [#tpu.dimension_semantics<parallel>, #tpu.dimension_semantics<arbitrary>], iteration_bounds = array<i64: 2, 1>, scalar_prefetch = 0 : i64, scratch_operands = 1 : i64, tpu.core_type = #tpu.core_type<tc>, window_params = [{transform_indices = @transform_0, window_bounds = array<i64: 1, 18, 8>}, {pipeline_mode = #tpu.pipeline_mode<synchronous>, transform_indices = @transform_1, window_bounds = array<i64: 16, 18>}, {transform_indices = @transform_2, window_bounds = array<i64: 1, 8, 8>}]} {
    %c0_i32 = arith.constant 0 : i32
    %0 = arith.cmpi eq, %arg1, %c0_i32 : i32
    %1 = arith.extui %0 : i1 to i32
    %c0_i32_0 = arith.constant 0 : i32
    %2 = arith.cmpi ne, %1, %c0_i32_0 : i32
    scf.if %2 {
      %cst_19 = arith.constant 0.000000e+00 : f32
      %22 = vector.broadcast %cst_19 : f32 to vector<8x9xf32>
      %c0_20 = arith.constant 0 : index
      %c0_21 = arith.constant 0 : index
      %23 = vector.load %arg5[%c0_20, %c0_21] : memref<8x9xf32, #tpu.memory_space<vmem>>, vector<8x9xf32>
      tpu.vector_store %arg5[%c0_20, %c0_21], %22 {strides = array<i32>} : memref<8x9xf32, #tpu.memory_space<vmem>>, vector<8x9xf32>,
    } else {
    }
    %c0_i32_1 = arith.constant 0 : i32
    %3 = arith.cmpi sgt, %arg1, %c0_i32_1 : i32
    %4 = arith.extui %3 : i1 to i32
    %c0_i32_2 = arith.constant 0 : i32
    %5 = arith.cmpi ne, %4, %c0_i32_2 : i32
    scf.if %5 {
      %c0_19 = arith.constant 0 : index
      %c8 = arith.constant 8 : index
      %22 = vector.load %arg5[%c0_19, %c8] : memref<8x9xf32, #tpu.memory_space<vmem>>, vector<8x1xf32>
      %cst_20 = arith.constant 0.000000e+00 : f32
      %23 = vector.broadcast %cst_20 : f32 to vector<8x9xf32>
      %c0_21 = arith.constant 0 : index
      %c0_22 = arith.constant 0 : index
      %24 = vector.load %arg5[%c0_21, %c0_22] : memref<8x9xf32, #tpu.memory_space<vmem>>, vector<8x9xf32>
      tpu.vector_store %arg5[%c0_21, %c0_22], %23 {strides = array<i32>} : memref<8x9xf32, #tpu.memory_space<vmem>>, vector<8x9xf32>,
      %c0_23 = arith.constant 0 : index
      %c0_24 = arith.constant 0 : index
      %25 = vector.load %arg5[%c0_23, %c0_24] : memref<8x9xf32, #tpu.memory_space<vmem>>, vector<8x1xf32>
      tpu.vector_store %arg5[%c0_23, %c0_24], %22 {strides = array<i32>} : memref<8x9xf32, #tpu.memory_space<vmem>>, vector<8x1xf32>,
    } else {
    }
    %c0 = arith.constant 0 : index
    %c0_3 = arith.constant 0 : index
    %6 = vector.load %arg3[%c0, %c0_3] : memref<16x18xf32, #tpu.memory_space<vmem>>, vector<16x18xf32>
    %c0_4 = arith.constant 0 : index
    %c0_5 = arith.constant 0 : index
    %c0_6 = arith.constant 0 : index
    %7 = vector.load %arg2[%c0_4, %c0_5, %c0_6] : memref<1x18x8xf32, #tpu.memory_space<vmem>>, vector<1x18x8xf32>
    %8 = vector.shape_cast %7 : vector<1x18x8xf32> to vector<18x8xf32>
    %cst = arith.constant dense<0.000000e+00> : vector<16x8xf32>
    %9 = tpu.matmul %6, %8, %cst {dimension_numbers = #tpu.dot_dimension_numbers<[1], [0], [0], [1], [0, 0, 1, 1], [], []>} : vector<16x18xf32>, vector<18x8xf32>, vector<16x8xf32> -> vector<16x8xf32>
    %c0_7 = arith.constant 0 : index
    %c0_8 = arith.constant 0 : index
    %10 = vector.load %arg5[%c0_7, %c0_8] : memref<8x9xf32, #tpu.memory_space<vmem>>, vector<8x8xf32>
    %11 = vector.extract_strided_slice %9 {offsets = [0, 0], sizes = [8, 8], strides = [1, 1]} : vector<16x8xf32> to vector<8x8xf32>
    %12 = arith.addf %10, %11 : vector<8x8xf32>
    %c0_9 = arith.constant 0 : index
    %c0_10 = arith.constant 0 : index
    %13 = vector.load %arg5[%c0_9, %c0_10] : memref<8x9xf32, #tpu.memory_space<vmem>>, vector<8x8xf32>
    tpu.vector_store %arg5[%c0_9, %c0_10], %12 {strides = array<i32>} : memref<8x9xf32, #tpu.memory_space<vmem>>, vector<8x8xf32>,
    %c0_11 = arith.constant 0 : index
    %c1 = arith.constant 1 : index
    %14 = vector.load %arg5[%c0_11, %c1] : memref<8x9xf32, #tpu.memory_space<vmem>>, vector<8x8xf32>
    %15 = vector.extract_strided_slice %9 {offsets = [8, 0], sizes = [8, 8], strides = [1, 1]} : vector<16x8xf32> to vector<8x8xf32>
    %16 = arith.addf %14, %15 : vector<8x8xf32>
    %c0_12 = arith.constant 0 : index
    %c1_13 = arith.constant 1 : index
    %17 = vector.load %arg5[%c0_12, %c1_13] : memref<8x9xf32, #tpu.memory_space<vmem>>, vector<8x8xf32>
    tpu.vector_store %arg5[%c0_12, %c1_13], %16 {strides = array<i32>} : memref<8x9xf32, #tpu.memory_space<vmem>>, vector<8x8xf32>,
    %c0_14 = arith.constant 0 : index
    %c0_15 = arith.constant 0 : index
    %18 = vector.load %arg5[%c0_14, %c0_15] : memref<8x9xf32, #tpu.memory_space<vmem>>, vector<8x8xf32>
    %c0_16 = arith.constant 0 : index
    %c0_17 = arith.constant 0 : index
    %c0_18 = arith.constant 0 : index
    %19 = vector.load %arg4[%c0_16, %c0_17, %c0_18] : memref<1x8x8xf32, #tpu.memory_space<vmem>>, vector<1x8x8xf32>
    %20 = vector.shape_cast %19 : vector<1x8x8xf32> to vector<8x8xf32>
    %21 = vector.shape_cast %18 : vector<8x8xf32> to vector<1x8x8xf32>
    tpu.vector_store %arg4[%c0_16, %c0_17, %c0_18], %21 {strides = array<i32>} : memref<1x8x8xf32, #tpu.memory_space<vmem>>, vector<1x8x8xf32>,
    return
  }
  func.func @transform_0(%arg0: i32, %arg1: i32) -> (i32, i32, i32) {
    %c0_i32 = arith.constant 0 : i32
    %c0_i32_0 = arith.constant 0 : i32
    return %arg0, %c0_i32, %arg1 : i32, i32, i32
  }
  func.func @transform_1(%arg0: i32, %arg1: i32) -> (i32, i32) {
    %c0_i32 = arith.constant 0 : i32
    %c0_i32_0 = arith.constant 0 : i32
    %c0_i32_1 = arith.constant 0 : i32
    return %c0_i32, %c0_i32_0 : i32, i32
  }
  func.func @transform_2(%arg0: i32, %arg1: i32) -> (i32, i32, i32) {
    %c0_i32 = arith.constant 0 : i32
    %c0_i32_0 = arith.constant 0 : i32
    return %arg0, %c0_i32, %arg1 : i32, i32, i32
  }
}

</mosaic_0001>

<llo_original>
// kernel: batch_inv_stft.1
$region0: #{batch_inv_stft.1}
  #allocation0 [shape = 'u32[]', space=smem, size = 0x4, offset = 0x4, fixed_abs, tag = 'smem constant byte address 0x4 - core index']
  #allocation1 [shape = 'u32[72,128]{1,0:T(1,128)}', space=vmem, size = 0x9000, scoped, tag = 'internal scratch']
  #allocation2 [shape = 'f32[8,9]{1,0:T(8,128)}', space=vmem, size = 0x1000, scoped, tag = 'scratch operand']
  %s0 = inlined_call_operand.vmem [shape: f32[2,18,8], index: 0, kind: input, shape index: {}]
  %s1 = inlined_call_operand.vmem [shape: f32[16,18], index: 1, kind: input, shape index: {}]
  %s2 = inlined_call_operand.vmem [shape: f32[2,8,8], index: 2, kind: output, shape index: {}]
  %s3 = sld [smem:[#allocation0]]
  $region49: #{batch_inv_stft.1} parent=0
    _
  %s5 = ssub.s32 1, %s3
  %s6 = scalar_select 0, %s5, %s3
  loop: start=0, step=1, limit=4
  $region2: #{batch_inv_stft.1} parent=0 // loop_pre_header
    _
  $region3: #{batch_inv_stft.1} parent=0 // loop_header
    %s8 = sphi 0, %s12
    %p9 = scmp.ge.s32.totalorder %s8, 4
    %s15 = sphi 0, %s27
    %s16 = sphi 0, %s23
    %s17 = sphi 0, %s15
    %s18 = sphi 0, %s16
    %s19 = sphi 0, %s17
    %s20 = sphi 0, %s18
    %s32 = sphi 0, %s34
    %s35 = sphi 0, %s32
    %s36 = sphi 0, %s35
    %s52 = sphi 0, %s36
    %s56 = sphi 0, %s56
    %s58 = sphi 0, %s56
    %s59 = sphi 0, %s58
    %s73 = sphi 0, %s59
    %s81 = sphi 0, %s83
    %s84 = sphi 0, %s81
    %s85 = sphi 0, %s84
    %s101 = sphi 0, %s85
  $region4: #{batch_inv_stft.1} parent=0 // loop_header_branch
    %11 = sbr.rel (%p9) target = $region8
  $region5: #{batch_inv_stft.1} parent=0 // loop_body
    %s13 = ssub.s32 %s8, 1
    %s14 = ssub.s32 %s8, 2
    %s21 = sadd.s32 1, %s16
    %p22 = scmp.ge.s32.totalorder %s21, 1
    %s23 = scalar_select %p22, 0, %s21
    %s24 = sadd.s32 1, %s15
    %s25 = scalar_select %p22, %s24, %s15
    %p26 = scmp.ge.s32.totalorder %s25, 2
    %s27 = scalar_select %p26, 0, %s25
    %s28 = ssub.s32 %s15, %s27
    %s29 = ssub.s32 %s16, %s23
    %s30 = sor.u32 %s28, %s29
    %p31 = scmp.eq.s32.totalorder %s30, 0
    %s33 = sadd.s32 %s32, 1
    %s34 = scalar_select %p31, %s32, %s33
    %p37 = pneg %p31
    %p38 = scmp.eq.s32.totalorder %s8, 1
    %p39 = por %p37, %p38
    %p40 = scmp.ne.s32.totalorder %s32, %s35
    %p41 = scmp.eq.s32.totalorder %s8, 0
    %p42 = por %p40, %p41
    %p43 = scmp.ne.s32.totalorder %s32, %s35
    %p44 = scmp.eq.s32.totalorder %s13, 1
    %p45 = por %p43, %p44
    %p46 = scmp.ne.s32.totalorder %s35, %s36
    %p47 = scmp.eq.s32.totalorder %s13, 0
    %p48 = por %p46, %p47
    %p49 = scmp.ne.s32.totalorder %s35, %s36
    %p50 = scmp.eq.s32.totalorder %s14, 1
    %p51 = por %p49, %p50
    %p53 = scmp.ne.s32.totalorder %s36, %s52
    %p54 = scmp.eq.s32.totalorder %s14, 0
    %p55 = por %p53, %p54
    %s57 = sadd.s32 %s56, 1
    %p60 = scmp.eq.s32.totalorder %s8, 1
    %p61 = scmp.ne.s32.totalorder %s56, %s58
    %p62 = scmp.eq.s32.totalorder %s8, 0
    %p63 = por %p61, %p62
    %p64 = scmp.ne.s32.totalorder %s56, %s58
    %p65 = scmp.eq.s32.totalorder %s13, 1
    %p66 = por %p64, %p65
    %p67 = scmp.ne.s32.totalorder %s58, %s59
    %p68 = scmp.eq.s32.totalorder %s13, 0
    %p69 = por %p67, %p68
    %p70 = scmp.ne.s32.totalorder %s58, %s59
    %p71 = scmp.eq.s32.totalorder %s14, 1
    %p72 = por %p70, %p71
    %p74 = scmp.ne.s32.totalorder %s59, %s73
    %p75 = scmp.eq.s32.totalorder %s14, 0
    %p76 = por %p74, %p75
    %s77 = ssub.s32 %s15, %s27
    %s78 = ssub.s32 %s16, %s23
    %s79 = sor.u32 %s77, %s78
    %p80 = scmp.eq.s32.totalorder %s79, 0
    %s82 = sadd.s32 %s81, 1
    %s83 = scalar_select %p80, %s81, %s82
    %p86 = pneg %p80
    %p87 = scmp.eq.s32.totalorder %s8, 1
    %p88 = por %p86, %p87
    %p89 = scmp.ne.s32.totalorder %s81, %s84
    %p90 = scmp.eq.s32.totalorder %s8, 0
    %p91 = por %p89, %p90
    %p92 = scmp.ne.s32.totalorder %s81, %s84
    %p93 = scmp.eq.s32.totalorder %s13, 1
    %p94 = por %p92, %p93
    %p95 = scmp.ne.s32.totalorder %s84, %s85
    %p96 = scmp.eq.s32.totalorder %s13, 0
    %p97 = por %p95, %p96
    %p98 = scmp.ne.s32.totalorder %s84, %s85
    %p99 = scmp.eq.s32.totalorder %s14, 1
    %p100 = por %p98, %p99
    %p102 = scmp.ne.s32.totalorder %s85, %s101
    %p103 = scmp.eq.s32.totalorder %s14, 0
    %p104 = por %p102, %p103
    %p105 = scmp.le.s32.totalorder 1, %s8
    %p106 = scmp.lt.s32.totalorder %s8, 3
    %p107 = pnand %p105, %p106
    %p108 = pneg %p107
    // Predicated region
    $region9: #{batch_inv_stft.1} parent=5 // pred_check
      _
    $region10: #{batch_inv_stft.1} parent=5 // pred_check_branch
      %110 = sbr.rel (%p107) target = $region12
    $region11: #{batch_inv_stft.1} parent=5 // pred_region
      %s111 = ssub.s32 %s8, 1
      // Predicated region
      $region13: #{batch_inv_stft.1} parent=11 // pred_check
        %p112 = pneg %p69
      $region14: #{batch_inv_stft.1} parent=11 // pred_check_branch
        %114 = sbr.rel (%p112) target = $region16
      $region15: #{batch_inv_stft.1} parent=11 // pred_region
        _
      $region16: #{batch_inv_stft.1} parent=11 // pred_fallthru
        _
    $region12: #{batch_inv_stft.1} parent=5 // pred_fallthru
      _
    %p115 = scmp.lt.s32.totalorder %s8, 2
    // Predicated region
    $region17: #{batch_inv_stft.1} parent=5 // pred_check
      %p116 = pneg %p115
    $region18: #{batch_inv_stft.1} parent=5 // pred_check_branch
      %118 = sbr.rel (%p116) target = $region20
    $region19: #{batch_inv_stft.1} parent=5 // pred_region
      // Predicated region
      $region21: #{batch_inv_stft.1} parent=19 // pred_check
        %p119 = pneg %p42
      $region22: #{batch_inv_stft.1} parent=19 // pred_check_branch
        %121 = sbr.rel (%p119) target = $region24
      $region23: #{batch_inv_stft.1} parent=19 // pred_region
        %p122 = scmp.lt.s32.totalorder %s15, 1
        %s123 = scalar_select %p122, %s15, 1
        %p124 = scmp.lt.s32.totalorder %s16, 0
        %s125 = scalar_select %p124, %s16, 0
        %s126 = smul.addr %s123, 3
        %s127 = sadd.s32 %s125, %s126
        %s128 = smul.addr %s127, 8
        %s129 = scalar_lea.vmem %s0, %s128
      $region24: #{batch_inv_stft.1} parent=19 // pred_fallthru
        _
    $region20: #{batch_inv_stft.1} parent=5 // pred_fallthru
      _
    %p130 = scmp.le.s32.totalorder 1, %s8
    %p131 = scmp.lt.s32.totalorder %s8, 3
    %p132 = pnand %p130, %p131
    %p133 = pneg %p132
    // Predicated region
    $region25: #{batch_inv_stft.1} parent=5 // pred_check
      _
    $region26: #{batch_inv_stft.1} parent=5 // pred_check_branch
      %135 = sbr.rel (%p132) target = $region28
    $region27: #{batch_inv_stft.1} parent=5 // pred_region
      %s136 = ssub.s32 %s8, 1
      %p137 = scmp.lt.s32.totalorder %s17, 1
      %s138 = scalar_select %p137, %s17, 1
      %p139 = scmp.lt.s32.totalorder %s18, 0
      %s140 = scalar_select %p139, %s18, 0
      %s141 = smul.addr %s138, 3
      %s142 = sadd.s32 %s140, %s141
      %s143 = smul.addr %s142, 8
      %s144 = scalar_lea.vmem %s0, %s143
      %p145 = pneg %p48
      %p146 = pneg %p45
      %p147 = pneg %p69
      %p148 = pneg %p66
      %p149 = pneg %p97
      %p150 = pneg %p94
      %p151 = scmp.lt.s32.totalorder %s17, 1
      %s152 = scalar_select %p151, %s17, 1
      %p153 = scmp.lt.s32.totalorder %s18, 0
      %s154 = scalar_select %p153, %s18, 0
      %s155 = sadd.s32 %s154, %s152
      %s156 = smul.addr %s155, 8
      %s157 = scalar_lea.vmem %s2, %s156
      %p158 = scmp.lt.s32.totalorder %s17, 1
      %s159 = scalar_select %p158, %s17, 1
      %p160 = scmp.lt.s32.totalorder %s18, 0
      %s161 = scalar_select %p160, %s18, 0
      %s162 = smul.addr %s159, 3
      %s163 = sadd.s32 %s161, %s162
      %s164 = smul.addr %s163, 8
      %s165 = scalar_lea.vmem %s0, %s164
      %p166 = scmp.lt.s32.totalorder %s17, 1
      %s167 = scalar_select %p166, %s17, 1
      %p168 = scmp.lt.s32.totalorder %s18, 0
      %s169 = scalar_select %p168, %s18, 0
      %s170 = sadd.s32 %s169, %s167
      %s171 = smul.addr %s170, 8
      %s172 = scalar_lea.vmem %s2, %s171
      %p173 = scmp.eq.s32.totalorder %s18, 0
      // Predicated region
      $region29: #{batch_inv_stft.1} parent=27 // pred_check
        %p174 = pneg %p173
      $region30: #{batch_inv_stft.1} parent=27 // pred_check_branch
        %176 = sbr.rel (%p174) target = $region32
      $region31: #{batch_inv_stft.1} parent=27 // pred_region
        %vm177 = vcmask 72704
        %178 = vst.msk [vmem:[#allocation2] sm:$0xff] %vm177, 0.0
      $region32: #{batch_inv_stft.1} parent=27 // pred_fallthru
        _
      %p179 = scmp.gt.s32.totalorder %s18, 0
      // Predicated region
      $region33: #{batch_inv_stft.1} parent=27 // pred_check
        %p180 = pneg %p179
      $region34: #{batch_inv_stft.1} parent=27 // pred_check_branch
        %182 = sbr.rel (%p180) target = $region36
      $region35: #{batch_inv_stft.1} parent=27 // pred_region
        %v183 = vld [vmem:[#allocation2] sm:$0xff]
        %vm184 = vcmask 72704
        %185 = vst.msk [vmem:[#allocation2] sm:$0xff] %vm184, 0.0
        %187 = vrot.lane.b32.xlu0 %v183, 120
        %v188 = vpop.permute.xlu0 %187
        %vm190 = vcmask 7168
        %191 = vst.msk [vmem:[#allocation2] sm:$0xff] %vm190, %v188
      $region36: #{batch_inv_stft.1} parent=27 // pred_fallthru
        _
      %v192 = vld [vmem:[%s1] sm:$0xff]
      %v193 = vld [vmem:[%s1 + $0x8] sm:$0xff]
      %v194 = vld [vmem:[%s165] sm:$0xff]
      %v195 = vld [vmem:[%s165 + $0x8] sm:$0xff]
      %v196 = vld [vmem:[%s165 + $0x10] sm:$0x3]
      %vm197 = vcmask 146432
      %v199 = vsel %vm197, %v192, 0
      %v202 = vsel %vm197, %v193, 0
      %vm204 = vcmask 1041408
      %v206 = vsel %vm204, %v196, 0
      %208 = vmatpush.msra.mxu0 0.0
      %209 = vmatpush.msra.mxu0 0.0
      %210 = vmatpush.msra.mxu0 0.0
      %211 = vmatpush.msra.mxu0 0.0
      %212 = vmatpush.msra.mxu0 0.0
      %213 = vmatpush.msra.mxu0 0.0
      %214 = vmatpush.msra.mxu0 0.0
      %215 = vmatpush.msra.mxu0 0.0
      %216 = vmatpush.msra.mxu0 0.0
      %217 = vmatpush.msra.mxu0 0.0
      %218 = vmatpush.msra.mxu0 0.0
      %219 = vmatpush.msra.mxu0 0.0
      %220 = vmatpush.msra.mxu0 0.0
      %221 = vmatpush.msra.mxu0 %v206
      %222 = vmatpush.msra.mxu0 %v195
      %223 = vmatpush.msra.mxu0 %v194
      %224 = vmatmul.f32.gmra.mxu0 %v199
      %v225 = vpop.f32.mrf.mxu0
      %v226 = vadd.f32 0.0, %v225
      %227 = vmatmul.f32.gmra.mxu0 %v202
      %v228 = vpop.f32.mrf.mxu0
      %v229 = vadd.f32 0.0, %v228
      %230 = vdwg.mxu0
      %v231 = vld [vmem:[#allocation2] sm:$0xff]
      %v232 = vadd.f32 %v231, %v226
      %vm233 = vcmask 64512
      %234 = vst.msk [vmem:[#allocation2] sm:$0xff] %vm233, %v232
      %v235 = vld [vmem:[#allocation2] sm:$0xff]
      %237 = vrot.lane.b32.xlu0 %v229, 1
      %v238 = vpop.permute.xlu0 %237
      %v240 = vadd.f32 %v235, %v238
      %vm241 = vcmask 72712
      %242 = vst.msk [vmem:[#allocation2] sm:$0xff] %vm241, %v240
      %v243 = vld [vmem:[#allocation2] sm:$0xff]
      %244 = vst.msk [vmem:[%s172] sm:$0xff] %vm233, %v243
      %p245 = scmp.lt.s32.totalorder %s17, 1
      %s246 = scalar_select %p245, %s17, 1
      %p247 = scmp.lt.s32.totalorder %s18, 0
      %s248 = scalar_select %p247, %s18, 0
      %s249 = sadd.s32 %s248, %s246
      %s250 = smul.addr %s249, 8
      %s251 = scalar_lea.vmem %s2, %s250
      // Predicated region
      $region37: #{batch_inv_stft.1} parent=27 // pred_check
        %p252 = pneg %p94
      $region38: #{batch_inv_stft.1} parent=27 // pred_check_branch
        %254 = sbr.rel (%p252) target = $region40
      $region39: #{batch_inv_stft.1} parent=27 // pred_region
        _
      $region40: #{batch_inv_stft.1} parent=27 // pred_fallthru
        _
    $region28: #{batch_inv_stft.1} parent=5 // pred_fallthru
      _
    %p255 = scmp.le.s32.totalorder 2, %s8
    // Predicated region
    $region41: #{batch_inv_stft.1} parent=5 // pred_check
      %p256 = pneg %p255
    $region42: #{batch_inv_stft.1} parent=5 // pred_check_branch
      %258 = sbr.rel (%p256) target = $region44
    $region43: #{batch_inv_stft.1} parent=5 // pred_region
      %s259 = ssub.s32 %s8, 2
      // Predicated region
      $region45: #{batch_inv_stft.1} parent=43 // pred_check
        %p260 = pneg %p100
      $region46: #{batch_inv_stft.1} parent=43 // pred_check_branch
        %262 = sbr.rel (%p260) target = $region48
      $region47: #{batch_inv_stft.1} parent=43 // pred_region
        %p263 = scmp.lt.s32.totalorder %s19, 1
        %s264 = scalar_select %p263, %s19, 1
        %p265 = scmp.lt.s32.totalorder %s20, 0
        %s266 = scalar_select %p265, %s20, 0
        %s267 = sadd.s32 %s266, %s264
        %s268 = smul.addr %s267, 8
        %s269 = scalar_lea.vmem %s2, %s268
      $region48: #{batch_inv_stft.1} parent=43 // pred_fallthru
        _
    $region44: #{batch_inv_stft.1} parent=5 // pred_fallthru
      _
  $region6: #{batch_inv_stft.1} parent=0 // loop_footer
    %s12 = sadd.s32 1, %s8
  $region7: #{batch_inv_stft.1} parent=0 // loop_footer_branch
    %7 = sbr.rel target = $region3
  $region8: #{batch_inv_stft.1} parent=0 // loop_exit
    _

</llo_original>
